<compile_context>
chip_gen: v6e
topology: v6e:2x2x1
jax: 0.10.0
libtpu: 0.0.40
codegen_flags: <defaults>
</compile_context>

<pallas_src>
import jax
import jax.numpy as jnp
from jax.experimental import pallas as pl
from jax.experimental.pallas import tpu as pltpu


_LANE = 128
_SMALL_N_FALLBACK = 1024     # below this, plain XLA beats kernel dispatch
_TWO_BLOCK_MIN_N = 8192      # guarantee >=2 parallel blocks above this (v7x: 2 TCs)
_TILE_VMEM_FRACTION = 0.5    # double-buffered in+out pipeline footprint ~ 128*T bytes


def _round_up(v, m):
    return ((v + m - 1) // m) * m


def _detect_vmem_bytes(default=64 * 1024 * 1024):
    """Physical VMEM per TensorCore; conservative 64 MiB fallback."""
    try:
        info = pltpu.get_tpu_info()
        v = getattr(info, "vmem_capacity_bytes", None)
        if v:
            return int(v)
    except Exception:
        pass
    return default


def _pick_tile(n, vmem_bytes):
    # Pipeline footprint: (3,T) and (1,T) f32 blocks both pad to 8 sublanes in
    # VMEM and are double-buffered -> ~128 * T bytes total.
    cap = int(vmem_bytes * _TILE_VMEM_FRACTION) // 128
    cap = max(_LANE, (cap // _LANE) * _LANE)          # ~512K (v5e/v6e), ~256K (v7x)
    if n <= _TWO_BLOCK_MIN_N:
        return n                                      # single full-array block
    # At least 2 blocks so the axis shards across both TCs on v7x; for very
    # large N the VMEM cap yields many blocks anyway.
    return max(_LANE, min(cap, _round_up(pl.cdiv(n, 2), _LANE)))


def _linear_kernel(wb_ref, x_ref, o_ref):
    # wb_ref: (4,) f32 in SMEM  -> [w0, w1, w2, b] scalars
    # x_ref : (3, T) f32 in VMEM, batch on lanes (lane-dense loads)
    # o_ref : (1, T) f32 in VMEM, lane-dense store
    w0 = wb_ref[0]
    w1 = wb_ref[1]
    w2 = wb_ref[2]
    b = wb_ref[3]
    # Read rows straight off the ref: three (1, T) vreg streams, pure VPU FMAs.
    o_ref[...] = (x_ref[0:1, :] * w0
                  + x_ref[1:2, :] * w1
                  + x_ref[2:3, :] * w2
                  + b)


def top_level_trace_model(x, w1, b1, *, tile_n=None, small_n_fallback=_SMALL_N_FALLBACK):
    """y = x @ w1 + b1, matching the PyTorch module (float32)."""
    x = x.astype(jnp.float32)
    w1 = w1.astype(jnp.float32)
    b1 = b1.astype(jnp.float32)
    n, k = x.shape
    assert k == 3 and w1.shape == (3, 1) and b1.shape == (1,)

    if n <= small_n_fallback:
        # Tiny batch: kernel dispatch + layout plumbing dominate; XLA is faster.
        return x @ w1 + b1

    vmem_bytes = _detect_vmem_bytes()
    tile = int(tile_n) if tile_n is not None else _pick_tile(n, vmem_bytes)
    if tile >= n:
        tile = n                      # block == full array (exempt from 128 rule)
        grid = (1,)
    else:
        tile = _round_up(tile, _LANE)  # lane dim must be a multiple of 128
        grid = (pl.cdiv(n, tile),)     # ragged last block is masked by Pallas

    # Pack the 4 parameter floats into one small SMEM-resident vector.
    wb = jnp.concatenate([w1.reshape(3), b1.reshape(1)])        # (4,) f32

    # Lane-dense layout: K(=3) on sublanes, batch N on lanes.
    # TODO(synk): callers that can provide x already as (3, N) should do so and
    # skip this transpose; allow_input_fusion below lets XLA fuse it otherwise.
    x_t = x.T                                                    # (3, N)

    # Raise the scoped-VMEM limit to cover the double-buffered big blocks
    # (default scoped limit is only 16/32 MiB on v5e/v6e), but never exceed
    # the physical budget (64 MiB per TC on v7x).
    vmem_limit = max(32 * 1024 * 1024, 128 * tile + 16 * 1024 * 1024)
    vmem_limit = max(16 * 1024 * 1024, min(vmem_limit, vmem_bytes - 8 * 1024 * 1024))

    y_t = pl.pallas_call(
        _linear_kernel,
        out_shape=jax.ShapeDtypeStruct((1, n), jnp.float32),
        grid=grid,
        in_specs=[
            # Whole 4-float parameter vector lives in SMEM (scalar reads, no tiles).
            pl.BlockSpec(memory_space=pltpu.MemorySpace.SMEM),
            # x tile: 3 sublanes x `tile` lanes, marched along the batch axis.
            pl.BlockSpec((k, tile), lambda i: (0, i)),
        ],
        out_specs=pl.BlockSpec((1, tile), lambda i: (0, i)),
        compiler_params=pltpu.CompilerParams(
            dimension_semantics=("parallel",),
            vmem_limit_bytes=int(vmem_limit),
            allow_input_fusion=[False, True],   # let XLA fuse the transpose into x_t
        ),
        cost_estimate=pl.CostEstimate(
            flops=6 * n, transcendentals=0, bytes_accessed=16 * n),
    )(wb, x_t)

    # Back to the PyTorch output layout (N, 1).
    return y_t.T


if __name__ == "__main__":
    key = jax.random.PRNGKey(0)
    kx, kw, kb = jax.random.split(key, 3)

    # Module shapes: w1 (3, 1), b1 (1,); input (N, 3).
    w1 = jax.random.normal(kw, (3, 1), dtype=jnp.float32)
    b1 = jax.random.normal(kb, (1,), dtype=jnp.float32)

    # 1) Small batch forced through the Pallas path (single full-array block).
    batch = 8
    x = jax.random.normal(kx, (batch, 3), dtype=jnp.float32)
    y = jax.block_until_ready(top_level_trace_model(x, w1, b1, small_n_fallback=0))
    y_ref = x @ w1 + b1
    assert y.shape == (batch, 1)
    assert jnp.allclose(y, y_ref, atol=1e-5, rtol=1e-5)

    # 2) Multi-block grid + ragged last block (no wrapper-side pad), under jit
    #    so allow_input_fusion can absorb the (N,3)->(3,N) transpose.
    batch2 = 300
    x2 = jax.random.normal(kx, (batch2, 3), dtype=jnp.float32)
    f = jax.jit(lambda a: top_level_trace_model(a, w1, b1, tile_n=128, small_n_fallback=0))
    y2 = jax.block_until_ready(f(x2))
    y2_ref = x2 @ w1 + b1
    assert y2.shape == (batch2, 1)
    assert jnp.allclose(y2, y2_ref, atol=1e-5, rtol=1e-5)

    # 3) Tiny-N fallback path (plain XLA).
    y3 = jax.block_until_ready(top_level_trace_model(x, w1, b1))
    assert jnp.allclose(y3, y_ref, atol=1e-5, rtol=1e-5)

    print("KERNEL_OK")
</pallas_src>

<mosaic_0001>
module attributes {stable_mosaic.version = 11 : i64} {
  func.func @_linear_kernel(%arg0: i32, %arg1: memref<4xf32, #tpu.memory_space<smem>>, %arg2: memref<3x8xf32, #tpu.memory_space<vmem>>, %arg3: memref<1x8xf32, #tpu.memory_space<vmem>>) attributes {dimension_semantics = [#tpu.dimension_semantics<parallel>], iteration_bounds = array<i64: 1>, scalar_prefetch = 0 : i64, scratch_operands = 0 : i64, tpu.core_type = #tpu.core_type<tc>, window_params = [{transform_indices = @transform_0, window_bounds = array<i64: 4>}, {transform_indices = @transform_1, window_bounds = array<i64: 3, 8>}, {transform_indices = @transform_2, window_bounds = array<i64: 1, 8>}]} {
    %c0 = arith.constant 0 : index
    %0 = memref.load %arg1[%c0] : memref<4xf32, #tpu.memory_space<smem>>
    %c1 = arith.constant 1 : index
    %1 = memref.load %arg1[%c1] : memref<4xf32, #tpu.memory_space<smem>>
    %c2 = arith.constant 2 : index
    %2 = memref.load %arg1[%c2] : memref<4xf32, #tpu.memory_space<smem>>
    %c3 = arith.constant 3 : index
    %3 = memref.load %arg1[%c3] : memref<4xf32, #tpu.memory_space<smem>>
    %c0_0 = arith.constant 0 : index
    %c0_1 = arith.constant 0 : index
    %4 = vector.load %arg2[%c0_0, %c0_1] : memref<3x8xf32, #tpu.memory_space<vmem>>, vector<1x8xf32>
    %5 = vector.broadcast %0 : f32 to vector<1x8xf32>
    %6 = arith.mulf %4, %5 : vector<1x8xf32>
    %c1_2 = arith.constant 1 : index
    %c0_3 = arith.constant 0 : index
    %7 = vector.load %arg2[%c1_2, %c0_3] : memref<3x8xf32, #tpu.memory_space<vmem>>, vector<1x8xf32>
    %8 = vector.broadcast %1 : f32 to vector<1x8xf32>
    %9 = arith.mulf %7, %8 : vector<1x8xf32>
    %10 = arith.addf %6, %9 : vector<1x8xf32>
    %c2_4 = arith.constant 2 : index
    %c0_5 = arith.constant 0 : index
    %11 = vector.load %arg2[%c2_4, %c0_5] : memref<3x8xf32, #tpu.memory_space<vmem>>, vector<1x8xf32>
    %12 = vector.broadcast %2 : f32 to vector<1x8xf32>
    %13 = arith.mulf %11, %12 : vector<1x8xf32>
    %14 = arith.addf %10, %13 : vector<1x8xf32>
    %15 = vector.broadcast %3 : f32 to vector<1x8xf32>
    %16 = arith.addf %14, %15 : vector<1x8xf32>
    %c0_6 = arith.constant 0 : index
    %c0_7 = arith.constant 0 : index
    %17 = vector.load %arg3[%c0_6, %c0_7] : memref<1x8xf32, #tpu.memory_space<vmem>>, vector<1x8xf32>
    tpu.vector_store %arg3[%c0_6, %c0_7], %16 {strides = array<i32>} : memref<1x8xf32, #tpu.memory_space<vmem>>, vector<1x8xf32>,
    return
  }
  func.func @transform_0(%arg0: i32) -> i32 {
    %c0_i32 = arith.constant 0 : i32
    %c0_i32_0 = arith.constant 0 : i32
    return %c0_i32 : i32
  }
  func.func @transform_1(%arg0: i32) -> (i32, i32) {
    %c0_i32 = arith.constant 0 : i32
    %c0_i32_0 = arith.constant 0 : i32
    return %c0_i32, %arg0 : i32, i32
  }
  func.func @transform_2(%arg0: i32) -> (i32, i32) {
    %c0_i32 = arith.constant 0 : i32
    %c0_i32_0 = arith.constant 0 : i32
    return %c0_i32, %arg0 : i32, i32
  }
}

</mosaic_0001>

<llo_original>
// kernel: tpu_custom_call.1
$region0: #{tpu_custom_call.1}
  #allocation0 [shape = 'u32[]', space=smem, size = 0x4, offset = 0x4, fixed_abs, tag = 'smem constant byte address 0x4 - core index']
  #allocation1 [shape = 'u32[144,128]{1,0:T(1,128)}', space=vmem, size = 0x12000, scoped, tag = 'internal scratch']
  %s0 = inlined_call_operand.hbm [shape: f32[4], index: 0, kind: input, shape index: {}]
  %s1 = inlined_call_operand.hbm [shape: f32[3,8], index: 1, kind: input, shape index: {}]
  %s2 = inlined_call_operand.hbm [shape: f32[1,8], index: 2, kind: output, shape index: {}]
  %s3 = sld [smem:[#allocation0]]
  $region26: #{tpu_custom_call.1} parent=0
    _
  %s5 = ssub.s32 1, %s3
  %s6 = scalar_select 0, %s5, %s3
  $region1: #{tpu_custom_call.1} parent=0
    #allocation2 [shape = 'u8[512]{0}', space=smem, size = 0x200, scoped, tag = 'input window, operand 0, single buffered']
    #allocation3 [shape = 's32[1]{0}', space=sflag, size = 0x4, scoped, tag = 'scoped memory for tpu_custom_call.1']
    #allocation4 [shape = 's32[1]{0}', space=sflag, size = 0x4, scoped, tag = 'scoped memory for tpu_custom_call.1']
    #allocation5 [shape = 's32[1]{0}', space=sflag, size = 0x4, scoped, tag = 'scoped memory for tpu_custom_call.1']
    #allocation6 [shape = 'u8[2048]{0}', space=vmem, size = 0x800, scoped, tag = 'input window, operand 1, single buffered']
    #allocation7 [shape = 'u8[512]{0}', space=vmem, size = 0x400, scoped, tag = 'output window, operand 0, single buffered']
    %7 = vsyncpa [#allocation5], 0
    %8 = vsyncpa [#allocation3], 0
    %9 = vsyncpa [#allocation4], 0
    // Predicated region
    $region2: #{tpu_custom_call.1} parent=1 // pred_check
      _
    $region3: #{tpu_custom_call.1} parent=1 // pred_check_branch
      %11 = sbr.rel (0) target = $region5
    $region4: #{tpu_custom_call.1} parent=1 // pred_region
      %s13 = ssub.s32 16, 16
      %14 = vsyncadd [#allocation5], %s13
      %17 = dma.hbm_to_smem %s0, 16, [#allocation2], [#allocation5]
    $region5: #{tpu_custom_call.1} parent=1 // pred_fallthru
      _
    // Predicated region
    $region6: #{tpu_custom_call.1} parent=1 // pred_check
      _
    $region7: #{tpu_custom_call.1} parent=1 // pred_check_branch
      %19 = sbr.rel (0) target = $region9
    $region8: #{tpu_custom_call.1} parent=1 // pred_region
      %s21 = ssub.s32 64, 64
      %22 = vsyncadd [#allocation3], %s21
      %s24 = sshll.u32 [#allocation6], 4
      %s25 = int_to_ptr.vmem [resolvable:$true] %s24
      %27 = dma.hbm_to_vmem [thread:$0]  %s1, 64, %s25, [#allocation3]
    $region9: #{tpu_custom_call.1} parent=1 // pred_fallthru
      _
    // Predicated region
    $region10: #{tpu_custom_call.1} parent=1 // pred_check
      _
    $region11: #{tpu_custom_call.1} parent=1 // pred_check_branch
      %29 = sbr.rel (0) target = $region13
    $region12: #{tpu_custom_call.1} parent=1 // pred_region
      %30 = dma.done [#allocation5], 16
    $region13: #{tpu_custom_call.1} parent=1 // pred_fallthru
      _
    // Predicated region
    $region14: #{tpu_custom_call.1} parent=1 // pred_check
      _
    $region15: #{tpu_custom_call.1} parent=1 // pred_check_branch
      %32 = sbr.rel (0) target = $region17
    $region16: #{tpu_custom_call.1} parent=1 // pred_region
      %33 = dma.done [#allocation3], 64
    $region17: #{tpu_custom_call.1} parent=1 // pred_fallthru
      _
    %34 = sfence
    %s35 = sld [smem:[#allocation2]]
    %s36 = sld [smem:[#allocation2 + $0x1]]
    %s37 = sld [smem:[#allocation2 + $0x2]]
    %s38 = sld [smem:[#allocation2 + $0x3]]
    %v39 = vld [vmem:[#allocation6] sm:$0x1]
    %v40 = vstv %s35
    %v41 = vmul.f32 %v39, %v40
    %v42 = vld [vmem:[#allocation6 + $0x1] sm:$0x1]
    %v43 = vstv %s36
    %v44 = vmul.f32 %v42, %v43
    %v45 = vadd.f32 %v41, %v44
    %v46 = vld [vmem:[#allocation6 + $0x2] sm:$0x1]
    %v47 = vstv %s37
    %v48 = vmul.f32 %v46, %v47
    %v49 = vadd.f32 %v45, %v48
    %v50 = vstv %s38
    %v51 = vadd.f32 %v49, %v50
    %vm52 = vcmask 57344
    %53 = vst.msk [vmem:[#allocation7] sm:$0x1] %vm52, %v51
    // Predicated region
    $region18: #{tpu_custom_call.1} parent=1 // pred_check
      _
    $region19: #{tpu_custom_call.1} parent=1 // pred_check_branch
      %55 = sbr.rel (0) target = $region21
    $region20: #{tpu_custom_call.1} parent=1 // pred_region
      %s57 = ssub.s32 16, 16
      %58 = vsyncadd [#allocation4], %s57
      %s60 = sshll.u32 [#allocation7], 4
      %s61 = int_to_ptr.vmem [resolvable:$true] %s60
      %63 = dma.vmem_to_hbm [thread:$0]  %s61, 16, %s2, [#allocation4]
    $region21: #{tpu_custom_call.1} parent=1 // pred_fallthru
      _
    // Predicated region
    $region22: #{tpu_custom_call.1} parent=1 // pred_check
      _
    $region23: #{tpu_custom_call.1} parent=1 // pred_check_branch
      %65 = sbr.rel (0) target = $region25
    $region24: #{tpu_custom_call.1} parent=1 // pred_region
      %66 = dma.done [#allocation4], 16
    $region25: #{tpu_custom_call.1} parent=1 // pred_fallthru
      _
    %67 = vsyncpa [#allocation3], 1
    %68 = vsyncpa [#allocation4], 1
    %69 = vsyncpa [#allocation5], 1

</llo_original>
